<compile_context>
chip_gen: v7x
topology: tpu7x:2x2x1
jax: 0.10.0
libtpu: 0.0.40
codegen_flags: <defaults>
</compile_context>

<pallas_src>
import functools
import math

import jax
import jax.numpy as jnp
from jax.experimental import pallas as pl
from jax.experimental.pallas import tpu as pltpu


# ---------------------------------------------------------------------------
# Module "buffer": positional-encoding table, identical to the PyTorch init.
# ---------------------------------------------------------------------------
def make_positional_encoding_table(d_model, max_len=128, dtype=jnp.float32):
    assert d_model % 2 == 0, "d_model must be even (same limitation as PyTorch module)"
    position = jnp.arange(max_len, dtype=jnp.float32)[:, None]          # (L, 1)
    div_term = jnp.exp(
        jnp.arange(0, d_model, 2, dtype=jnp.float32)
        * (-math.log(10000.0) / d_model))                               # (D/2,)
    angles = position * div_term                                        # (L, D/2)
    pe = jnp.zeros((max_len, d_model), dtype=jnp.float32)
    pe = pe.at[:, 0::2].set(jnp.sin(angles))
    pe = pe.at[:, 1::2].set(jnp.cos(angles))
    # unsqueeze(0).transpose(0, 1)  ->  (max_len, 1, d_model)
    return pe[:, None, :].astype(dtype)


# ---------------------------------------------------------------------------
# Kernel: one sequence tile of the lane-folded view.
#   x block:  (ts, B*D)   pe block: (ts, D)
# pe is broadcast over batch by concatenating it B times along lanes, then a
# single full-width dense add + store (pure VPU work, kernel stays HBM-bound).
# ---------------------------------------------------------------------------
def _posenc_kernel(x_ref, pe_ref, o_ref, *, batch):
    p = pe_ref[...]                                   # (ts, D)
    if batch > 1:
        p = jnp.concatenate([p] * batch, axis=-1)     # (ts, B*D)
    o_ref[...] = x_ref[...] + p


# ---------------------------------------------------------------------------
# Tile selection.
# ---------------------------------------------------------------------------
def _round_up(x, m):
    return ((x + m - 1) // m) * m


def _choose_tile_seq(seq_len, batch, d_model, itemsize, budget_bytes=8 << 20):
    """Sequence-tile size for ~8 MiB (VMEM-padded) x blocks, >=4 grid steps,
    multiple-of-8 sublanes, preferring a divisor of seq_len."""
    # Padded VMEM bytes per sequence row (lane dim rounds up to 128).
    row_bytes = _round_up(batch * d_model, 128) * itemsize
    ts = max(1, budget_bytes // row_bytes)
    # Keep at least ~4 grid steps so both v7x TensorCores get work.
    ts = min(ts, max(8, -(-seq_len // 4)))
    if ts >= seq_len:
        return seq_len                      # single full block (no 8-div needed)
    ts = max(8, (ts // 8) * 8)              # sublane constraint for partial blocks
    if ts >= seq_len:
        return seq_len
    # Prefer a tile that divides seq_len (no masked trailing block), but do not
    # shrink below half the budgeted tile.
    for cand in range(ts, max(7, ts // 2 - 1), -8):
        if seq_len % cand == 0:
            return cand
    return ts


# ---------------------------------------------------------------------------
# Wrapper: forward pass (eval mode -> dropout is identity).
# ---------------------------------------------------------------------------
def positional_encoding_forward(x, pe, *, dropout_rate=0.1, tile_seq=None,
                                force_pallas=False):
    """x: (S, B, D), pe: (max_len, 1, D).  Returns x + pe[:S] (eval forward)."""
    del dropout_rate  # identity at inference; see TODO(synk) above.
    S, B, D = x.shape
    assert pe.shape[0] >= S and pe.shape[1] == 1 and pe.shape[2] == D

    pe_s = pe[:S].astype(x.dtype)                    # (S, 1, D), native dtype

    itemsize = jnp.dtype(x.dtype).itemsize
    if not force_pallas and S * B * D * itemsize < (1 << 20):
        # Tiny input: pallas_call dispatch + grid-step overhead exceeds copy time.
        return x + pe_s

    # Lane-fold: (S, B, D) row-major -> (S, B*D) is a free view; seq on
    # sublanes, batch*d_model on lanes (lane-dense loads/stores).
    x2 = x.reshape(S, B * D)
    pe2 = pe_s.reshape(S, D)

    ts = tile_seq if tile_seq is not None else _choose_tile_seq(S, B, D, itemsize)
    grid = (pl.cdiv(S, ts),)

    out2 = pl.pallas_call(
        functools.partial(_posenc_kernel, batch=B),
        out_shape=jax.ShapeDtypeStruct((S, B * D), x.dtype),
        grid=grid,
        in_specs=[
            pl.BlockSpec((ts, B * D), lambda i: (i, 0)),
            pl.BlockSpec((ts, D), lambda i: (i, 0)),
        ],
        out_specs=pl.BlockSpec((ts, B * D), lambda i: (i, 0)),
        compiler_params=pltpu.CompilerParams(
            dimension_semantics=("parallel",),
            vmem_limit_bytes=48 << 20),
    )(x2, pe2)

    return out2.reshape(S, B, D)


# ---------------------------------------------------------------------------
# Reference + self-test.
# ---------------------------------------------------------------------------
def _reference_forward(x, pe):
    return x + pe[: x.shape[0]]


if __name__ == "__main__":
    MAX_LEN = 128
    D = 32

    pe = make_positional_encoding_table(D, max_len=MAX_LEN)     # (128, 1, 32)

    # Case 1: small module-sized shape, forced through the Pallas kernel.
    S, B = 8, 2
    x = jax.random.normal(jax.random.PRNGKey(0), (S, B, D), dtype=jnp.float32)
    out = positional_encoding_forward(x, pe, force_pallas=True)
    out = jax.block_until_ready(out)
    ref = _reference_forward(x, pe)
    assert out.shape == (S, B, D)
    assert jnp.allclose(out, ref, rtol=1e-6, atol=1e-6), (
        float(jnp.max(jnp.abs(out - ref))))

    # Case 2: multi-tile grid (exercises the pipelined BlockSpecs, grid > 1).
    S2, B2 = 64, 2
    x2 = jax.random.normal(jax.random.PRNGKey(1), (S2, B2, D), dtype=jnp.float32)
    out2 = positional_encoding_forward(x2, pe, force_pallas=True, tile_seq=16)
    out2 = jax.block_until_ready(out2)
    ref2 = _reference_forward(x2, pe)
    assert jnp.allclose(out2, ref2, rtol=1e-6, atol=1e-6), (
        float(jnp.max(jnp.abs(out2 - ref2))))

    # Case 3: default small-shape XLA fast path still matches.
    out3 = positional_encoding_forward(x, pe)
    assert jnp.allclose(out3, ref, rtol=1e-6, atol=1e-6)

    print("KERNEL_OK")
</pallas_src>

<mosaic_0001>
module attributes {stable_mosaic.version = 11 : i64} {
  func.func @_posenc_kernel(%arg0: i32, %arg1: memref<8x64xf32, #tpu.memory_space<vmem>>, %arg2: memref<8x32xf32, #tpu.memory_space<vmem>>, %arg3: memref<8x64xf32, #tpu.memory_space<vmem>>) attributes {dimension_semantics = [#tpu.dimension_semantics<parallel>], iteration_bounds = array<i64: 1>, scalar_prefetch = 0 : i64, scratch_operands = 0 : i64, tpu.core_type = #tpu.core_type<tc>, window_params = [{transform_indices = @transform_0, window_bounds = array<i64: 8, 64>}, {transform_indices = @transform_1, window_bounds = array<i64: 8, 32>}, {transform_indices = @transform_2, window_bounds = array<i64: 8, 64>}]} {
    %c0 = arith.constant 0 : index
    %c0_0 = arith.constant 0 : index
    %0 = vector.load %arg2[%c0, %c0_0] : memref<8x32xf32, #tpu.memory_space<vmem>>, vector<8x32xf32>
    %1 = tpu.concatenate %0, %0 in 1 : vector<8x32xf32>, vector<8x32xf32> -> vector<8x64xf32>
    %c0_1 = arith.constant 0 : index
    %c0_2 = arith.constant 0 : index
    %2 = vector.load %arg1[%c0_1, %c0_2] : memref<8x64xf32, #tpu.memory_space<vmem>>, vector<8x64xf32>
    %3 = arith.addf %2, %1 : vector<8x64xf32>
    %c0_3 = arith.constant 0 : index
    %c0_4 = arith.constant 0 : index
    %4 = vector.load %arg3[%c0_3, %c0_4] : memref<8x64xf32, #tpu.memory_space<vmem>>, vector<8x64xf32>
    tpu.vector_store %arg3[%c0_3, %c0_4], %3 {strides = array<i32>} : memref<8x64xf32, #tpu.memory_space<vmem>>, vector<8x64xf32>,
    return
  }
  func.func @transform_0(%arg0: i32) -> (i32, i32) {
    %c0_i32 = arith.constant 0 : i32
    %c0_i32_0 = arith.constant 0 : i32
    return %arg0, %c0_i32 : i32, i32
  }
  func.func @transform_1(%arg0: i32) -> (i32, i32) {
    %c0_i32 = arith.constant 0 : i32
    %c0_i32_0 = arith.constant 0 : i32
    return %arg0, %c0_i32 : i32, i32
  }
  func.func @transform_2(%arg0: i32) -> (i32, i32) {
    %c0_i32 = arith.constant 0 : i32
    %c0_i32_0 = arith.constant 0 : i32
    return %arg0, %c0_i32 : i32, i32
  }
}

</mosaic_0001>

<llo_original>
// kernel: tpu_custom_call.1
$region0: #{tpu_custom_call.1}
  #allocation0 [shape = 'u32[]', space=smem, size = 0x4, offset = 0x4, fixed_abs, tag = 'smem constant byte address 0x4 - core index']
  #allocation1 [shape = 'u32[144,128]{1,0:T(1,128)}', space=vmem, size = 0x12000, scoped, tag = 'internal scratch']
  %s0 = inlined_call_operand.hbm [shape: f32[8,64], index: 0, kind: input, shape index: {}]
  %s1 = inlined_call_operand.hbm [shape: f32[8,32], index: 1, kind: input, shape index: {}]
  %s2 = inlined_call_operand.hbm [shape: f32[8,64], index: 2, kind: output, shape index: {}]
  %s3 = sld [smem:[#allocation0]]
  $region26: #{tpu_custom_call.1} parent=0
    _
  %s5 = ssub.s32 1, %s3
  %s6 = scalar_select 0, %s5, %s3
  $region1: #{tpu_custom_call.1} parent=0
    #allocation2 [shape = 'u8[4096]{0}', space=vmem, size = 0x1000, scoped, tag = 'input window, operand 0, single buffered']
    #allocation3 [shape = 's32[1]{0}', space=sflag, size = 0x4, scoped, tag = 'scoped memory for tpu_custom_call.1']
    #allocation4 [shape = 's32[1]{0}', space=sflag, size = 0x4, scoped, tag = 'scoped memory for tpu_custom_call.1']
    #allocation5 [shape = 'u8[4096]{0}', space=vmem, size = 0x1000, scoped, tag = 'input window, operand 1, single buffered']
    #allocation6 [shape = 's32[1]{0}', space=sflag, size = 0x4, scoped, tag = 'scoped memory for tpu_custom_call.1']
    #allocation7 [shape = 'u8[4096]{0}', space=vmem, size = 0x1000, scoped, tag = 'output window, operand 0, single buffered']
    %7 = vsyncpa [#allocation3], 0
    %8 = vsyncpa [#allocation6], 0
    %9 = vsyncpa [#allocation4], 0
    // Predicated region
    $region2: #{tpu_custom_call.1} parent=1 // pred_check
      _
    $region3: #{tpu_custom_call.1} parent=1 // pred_check_branch
      %11 = sbr.rel (0) target = $region5
    $region4: #{tpu_custom_call.1} parent=1 // pred_region
      %s13 = ssub.s32 128, 128
      %14 = vsyncadd [#allocation3], %s13
      %s16 = sshll.u32 [#allocation2], 4
      %s17 = int_to_ptr.vmem [resolvable:$true] %s16
      %19 = dma.hbm_to_vmem [thread:$0]  %s0, 128, %s17, [#allocation3]
    $region5: #{tpu_custom_call.1} parent=1 // pred_fallthru
      _
    // Predicated region
    $region6: #{tpu_custom_call.1} parent=1 // pred_check
      _
    $region7: #{tpu_custom_call.1} parent=1 // pred_check_branch
      %21 = sbr.rel (0) target = $region9
    $region8: #{tpu_custom_call.1} parent=1 // pred_region
      %s23 = ssub.s32 128, 128
      %24 = vsyncadd [#allocation6], %s23
      %s26 = sshll.u32 [#allocation5], 4
      %s27 = int_to_ptr.vmem [resolvable:$true] %s26
      %29 = dma.hbm_to_vmem [thread:$0]  %s1, 128, %s27, [#allocation6]
    $region9: #{tpu_custom_call.1} parent=1 // pred_fallthru
      _
    // Predicated region
    $region10: #{tpu_custom_call.1} parent=1 // pred_check
      _
    $region11: #{tpu_custom_call.1} parent=1 // pred_check_branch
      %31 = sbr.rel (0) target = $region13
    $region12: #{tpu_custom_call.1} parent=1 // pred_region
      %32 = dma.done [#allocation3], 128
    $region13: #{tpu_custom_call.1} parent=1 // pred_fallthru
      _
    // Predicated region
    $region14: #{tpu_custom_call.1} parent=1 // pred_check
      _
    $region15: #{tpu_custom_call.1} parent=1 // pred_check_branch
      %34 = sbr.rel (0) target = $region17
    $region16: #{tpu_custom_call.1} parent=1 // pred_region
      %35 = dma.done [#allocation6], 128
    $region17: #{tpu_custom_call.1} parent=1 // pred_fallthru
      _
    %v36 = vld [vmem:[#allocation5] sm:$0xff]
    %38 = vrot.lane.b32.xlu0 %v36, 32
    %v39 = vpop.permute.xlu0 %38
    %vm41 = vcmask 261120
    %v42 = vsel %vm41, %v36, %v39
    %v43 = vld [vmem:[#allocation2] sm:$0xff]
    %v44 = vadd.f32 %v43, %v42
    %vm45 = vcmask 523264
    %46 = vst.msk [vmem:[#allocation7] sm:$0xff] %vm45, %v44
    // Predicated region
    $region18: #{tpu_custom_call.1} parent=1 // pred_check
      _
    $region19: #{tpu_custom_call.1} parent=1 // pred_check_branch
      %48 = sbr.rel (0) target = $region21
    $region20: #{tpu_custom_call.1} parent=1 // pred_region
      %s50 = ssub.s32 128, 128
      %51 = vsyncadd [#allocation4], %s50
      %s53 = sshll.u32 [#allocation7], 4
      %s54 = int_to_ptr.vmem [resolvable:$true] %s53
      %56 = dma.vmem_to_hbm [thread:$0]  %s54, 128, %s2, [#allocation4]
    $region21: #{tpu_custom_call.1} parent=1 // pred_fallthru
      _
    // Predicated region
    $region22: #{tpu_custom_call.1} parent=1 // pred_check
      _
    $region23: #{tpu_custom_call.1} parent=1 // pred_check_branch
      %58 = sbr.rel (0) target = $region25
    $region24: #{tpu_custom_call.1} parent=1 // pred_region
      %59 = dma.done [#allocation4], 128
    $region25: #{tpu_custom_call.1} parent=1 // pred_fallthru
      _
    %60 = vsyncpa [#allocation3], 1
    %61 = vsyncpa [#allocation6], 1
    %62 = vsyncpa [#allocation4], 1

</llo_original>
